<compile_context>
chip_gen: v7x
topology: tpu7x:2x2x1
jax: 0.10.0
libtpu: 0.0.40
codegen_flags: <defaults>
</compile_context>

<pallas_src>
import functools

import numpy as np
import jax
import jax.numpy as jnp
from jax.experimental import pallas as pl
from jax.experimental.pallas import tpu as pltpu

LANE = 128


def _round_up(n, m):
    return ((n + m - 1) // m) * m


def _generator_kernel(n_linear, *refs):
    """refs = (inputs, mask, W1a, W1b, b1, W2, b2, ..., Wn, bn, seg, out)."""
    x_ref, m_ref = refs[0], refs[1]
    flat = refs[2:2 + 2 * n_linear + 1]
    seg_ref = refs[2 * n_linear + 3]
    o_ref = refs[2 * n_linear + 4]

    # ---- Layer 0: split-weight form of Linear(cat([inputs, mask])) ----
    w1a = flat[0][...]                     # (out_size, h1_pad) matmul dtype
    w1b = flat[1][...]                     # (out_size, h1_pad) matmul dtype
    b1 = flat[2][...]                      # (1, h1_pad) f32
    h = (b1
         + jnp.dot(x_ref[...].astype(w1a.dtype), w1a,
                   preferred_element_type=jnp.float32)
         + jnp.dot(m_ref[...].astype(w1b.dtype), w1b,
                   preferred_element_type=jnp.float32))
    if n_linear > 1:                       # Tanh follows every hidden Linear
        h = jnp.tanh(h)

    # ---- Remaining Linear (+ Tanh) layers ----
    for li in range(1, n_linear):
        w = flat[2 * li + 1][...]          # (p_in, p_out) matmul dtype
        b = flat[2 * li + 2][...]          # (1, p_out) f32
        h = b + jnp.dot(h.astype(w.dtype), w, preferred_element_type=jnp.float32)
        if li < n_linear - 1:
            h = jnp.tanh(h)

    # ---- Mixed activation: one exp + one seg matmul + one approx recip ----
    # Padded output lanes of h are exactly 0 (zero-padded weights & bias), so
    # the row max is >= 0 (exp never overflows) and exp(0 - rowmax) gives us
    # exp(-rowmax) "for free" in the first padded lane.  seg routes:
    #   categorical lane j : denom_j = sum_{k in block} e_k      -> softmax
    #   real lane j        : denom_j = e_j + e_pad0              -> sigmoid
    m_row = jnp.max(h, axis=-1, keepdims=True)
    e = jnp.exp(h - m_row)
    denom = jnp.dot(e.astype(seg_ref.dtype), seg_ref[...],
                    preferred_element_type=jnp.float32)
    denom = jnp.maximum(denom, 1e-30)      # guard: no inf/NaN on underflow
    o_ref[...] = (e * pl.reciprocal(denom, approx=True)).astype(o_ref.dtype)


def prepare_generator_params(params, features, matmul_dtype=jnp.bfloat16):
    """One-time parameter prep: split layer 0 into inputs/mask halves,
    transpose, lane-pad to 128, cast weights to the MXU dtype, and build the
    block-diagonal segment matrix that implements the mixed activation."""
    n_linear = len(params)
    out_size = params[-1][0].shape[0]
    in_size = params[0][0].shape[1]
    assert in_size == 2 * out_size, "first layer must take cat([inputs, mask])"
    dims = [in_size] + [w.shape[0] for w, _ in params]
    for li, (w, _) in enumerate(params):
        assert w.shape[1] == dims[li], "layer sizes inconsistent"

    # Padded OUTPUT dim per layer.  The final layer is guaranteed at least one
    # padded lane (needed for the sigmoid-via-segment-matmul trick).
    pout = [_round_up(d, LANE) for d in dims[1:]]
    if pout[-1] == out_size:
        pout[-1] += LANE

    flat = []
    # Layer 0: column-split the torch (d1, 2*out_size) weight into the
    # inputs-half and the mask-half; keep the contraction dim at the native
    # out_size (the streamed activations are NOT lane-padded).
    w0, b0 = params[0]
    w0 = np.asarray(w0, np.float32)
    d1, p1 = dims[1], pout[0]
    wa = np.zeros((out_size, p1), np.float32)
    wb = np.zeros((out_size, p1), np.float32)
    wa[:, :d1] = w0[:, :out_size].T
    wb[:, :d1] = w0[:, out_size:].T
    bb = np.zeros((1, p1), np.float32)
    bb[0, :d1] = np.asarray(b0, np.float32)
    flat += [jnp.asarray(wa, matmul_dtype), jnp.asarray(wb, matmul_dtype),
             jnp.asarray(bb, jnp.float32)]

    # Remaining layers: transpose + zero-pad both dims to the padded sizes.
    for li in range(1, n_linear):
        w, b = params[li]
        d_in, d_out = dims[li], dims[li + 1]
        p_in, p_out = pout[li - 1], pout[li]
        wt = np.zeros((p_in, p_out), np.float32)
        wt[:d_in, :d_out] = np.asarray(w, np.float32).T
        bp_ = np.zeros((1, p_out), np.float32)
        bp_[0, :d_out] = np.asarray(b, np.float32)
        flat += [jnp.asarray(wt, matmul_dtype), jnp.asarray(bp_, jnp.float32)]

    # Segment matrix for the mixed activation (stored in the MXU dtype; its
    # 0/1 entries are exact in bf16).
    p_out_final = pout[-1]
    seg = np.zeros((p_out_final, p_out_final), np.float32)
    pad0 = out_size                         # first padded lane: h == 0 exactly
    off = 0
    for ftype, fsize in features:
        if ftype == "categorical":
            seg[off:off + fsize, off:off + fsize] = 1.0
        else:  # continuous / "real": sigmoid(h_j) = e_j / (e_j + exp(-rowmax))
            for j in range(off, off + fsize):
                seg[j, j] = 1.0
                seg[pad0, j] = 1.0
        off += fsize
    assert off == out_size, "features must sum to out_size"
    for j in range(out_size, p_out_final):  # padded lanes: harmless identity
        seg[j, j] = 1.0

    return {
        "flat": flat,
        "n_linear": n_linear,
        "out_size": out_size,
        "out_pad": p_out_final,
        "seg": jnp.asarray(seg, matmul_dtype),
        "act_dtype": matmul_dtype,
    }


def generator_forward(inputs, mask, prep, *, block_batch=512,
                      out_dtype=jnp.float32):
    """inputs, mask: (B, out_size); prep from prepare_generator_params."""
    B, fs = inputs.shape
    out_size, out_pad = prep["out_size"], prep["out_pad"]
    assert fs == out_size and mask.shape == inputs.shape
    n_linear = prep["n_linear"]
    flat = prep["flat"]
    act_dtype = prep["act_dtype"]

    # Batch tile: big tiles amortize per-step overhead; if the grid would
    # collapse to a single step, split so both v7x TensorCores get work.
    tb = min(block_batch, _round_up(B, 8))
    if B >= 16 and _round_up(B, tb) == tb:
        tb = _round_up((B + 1) // 2, 8)
    bp = _round_up(B, tb)

    # Stream activations in the MXU dtype; no concat, no feature-dim padding.
    x = inputs.astype(act_dtype)
    m = mask.astype(act_dtype)
    if bp != B:
        x = jnp.pad(x, ((0, bp - B), (0, 0)))
        m = jnp.pad(m, ((0, bp - B), (0, 0)))

    def resident(arr):  # whole-array VMEM-resident block (constant index_map)
        return pl.BlockSpec(arr.shape, lambda i: (0, 0))

    in_specs = [pl.BlockSpec((tb, out_size), lambda i: (i, 0)),
                pl.BlockSpec((tb, out_size), lambda i: (i, 0))]
    in_specs += [resident(p) for p in flat]
    in_specs += [resident(prep["seg"])]
    out_spec = pl.BlockSpec((tb, out_pad), lambda i: (i, 0))

    # Only raise the scoped-VMEM limit when the footprint actually needs it
    # (v5e default is 16 MiB; v7x has 64 MiB physical).
    itemsize = lambda a: a.size * a.dtype.itemsize
    resident_bytes = sum(itemsize(p) for p in flat) + itemsize(prep["seg"])
    stream_bytes = (4 * tb * out_size * jnp.dtype(act_dtype).itemsize
                    + 2 * tb * out_pad * jnp.dtype(out_dtype).itemsize)
    vmem_est = 2 * resident_bytes + stream_bytes
    cp_kwargs = dict(dimension_semantics=("parallel",))
    if vmem_est > 12 * 1024 * 1024:
        cp_kwargs["vmem_limit_bytes"] = min(int(vmem_est * 3 // 2),
                                            100 * 1024 * 1024)

    fn = pl.pallas_call(
        functools.partial(_generator_kernel, n_linear),
        out_shape=jax.ShapeDtypeStruct((bp, out_pad), out_dtype),
        grid=(bp // tb,),
        in_specs=in_specs,
        out_specs=out_spec,
        compiler_params=pltpu.CompilerParams(**cp_kwargs),
    )
    out = fn(x, m, *flat, prep["seg"])
    return out[:B, :out_size]


def init_generator_params(key, out_size, hidden_sizes):
    """Deterministic torch.nn.Linear-style init (uniform +-1/sqrt(fan_in))."""
    params = []
    prev = out_size * 2
    sizes = list(hidden_sizes) + [out_size]
    for layer_size in sizes:
        key, kw, kb = jax.random.split(key, 3)
        bound = 1.0 / jnp.sqrt(prev)
        w = jax.random.uniform(kw, (layer_size, prev), jnp.float32, -bound, bound)
        b = jax.random.uniform(kb, (layer_size,), jnp.float32, -bound, bound)
        params.append((w, b))
        prev = layer_size
    return params


if __name__ == "__main__":
    key = jax.random.PRNGKey(0)

    B = 8
    out_size = 16
    hidden_sizes = [32, 32]
    # 8 continuous features, then two categorical features one-hot encoded
    # with 4 categories each (8 + 4 + 4 == out_size).
    features = (("real", 8), ("categorical", 4), ("categorical", 4))

    key, k_in, k_mask, k_par = jax.random.split(key, 4)
    inputs = jax.random.uniform(k_in, (B, out_size), jnp.float32)
    mask = (jax.random.uniform(k_mask, (B, out_size)) > 0.5).astype(jnp.float32)
    params = init_generator_params(k_par, out_size, hidden_sizes)

    # Pure-JAX reference of the PyTorch math.
    def ref(x, m):
        h = jnp.concatenate([x, m], axis=1)
        for i, (w, b) in enumerate(params):
            h = h @ w.T + b
            if i < len(params) - 1:
                h = jnp.tanh(h)
        pieces, off = [], 0
        for ftype, fsize in features:
            sl = h[:, off:off + fsize]
            pieces.append(jax.nn.sigmoid(sl) if ftype == "real"
                          else jax.nn.softmax(sl, axis=-1))
            off += fsize
        return jnp.concatenate(pieces, axis=-1)

    ref_out = ref(inputs, mask)

    # Strict-math check: f32 MXU operands (tolerance covers approx reciprocal).
    prep_f32 = prepare_generator_params(params, features, matmul_dtype=jnp.float32)
    out_f32 = jax.block_until_ready(generator_forward(inputs, mask, prep_f32))
    assert out_f32.shape == (B, out_size)
    assert jnp.allclose(out_f32, ref_out, atol=5e-3, rtol=5e-3), (
        float(jnp.max(jnp.abs(out_f32 - ref_out))))

    # Fast path: bf16 streamed activations + bf16 MXU with f32 accumulation.
    prep_bf16 = prepare_generator_params(params, features, matmul_dtype=jnp.bfloat16)
    out_bf16 = jax.block_until_ready(generator_forward(inputs, mask, prep_bf16))
    assert out_bf16.shape == (B, out_size)
    assert jnp.allclose(out_bf16, ref_out, atol=5e-2, rtol=5e-2), (
        float(jnp.max(jnp.abs(out_bf16 - ref_out))))

    print("KERNEL_OK")
</pallas_src>

<mosaic_0001>
module attributes {stable_mosaic.version = 11 : i64} {
  func.func @_generator_kernel(%arg0: i32, %arg1: memref<8x16xf32, #tpu.memory_space<vmem>>, %arg2: memref<8x16xf32, #tpu.memory_space<vmem>>, %arg3: memref<16x128xf32, #tpu.memory_space<vmem>>, %arg4: memref<16x128xf32, #tpu.memory_space<vmem>>, %arg5: memref<1x128xf32, #tpu.memory_space<vmem>>, %arg6: memref<128x128xf32, #tpu.memory_space<vmem>>, %arg7: memref<1x128xf32, #tpu.memory_space<vmem>>, %arg8: memref<128x128xf32, #tpu.memory_space<vmem>>, %arg9: memref<1x128xf32, #tpu.memory_space<vmem>>, %arg10: memref<128x128xf32, #tpu.memory_space<vmem>>, %arg11: memref<8x128xf32, #tpu.memory_space<vmem>>) attributes {dimension_semantics = [#tpu.dimension_semantics<parallel>], iteration_bounds = array<i64: 1>, scalar_prefetch = 0 : i64, scratch_operands = 0 : i64, tpu.core_type = #tpu.core_type<tc>, window_params = [{transform_indices = @transform_0, window_bounds = array<i64: 8, 16>}, {transform_indices = @transform_1, window_bounds = array<i64: 8, 16>}, {pipeline_mode = #tpu.pipeline_mode<synchronous>, transform_indices = @transform_2, window_bounds = array<i64: 16, 128>}, {pipeline_mode = #tpu.pipeline_mode<synchronous>, transform_indices = @transform_3, window_bounds = array<i64: 16, 128>}, {pipeline_mode = #tpu.pipeline_mode<synchronous>, transform_indices = @transform_4, window_bounds = array<i64: 1, 128>}, {pipeline_mode = #tpu.pipeline_mode<synchronous>, transform_indices = @transform_5, window_bounds = array<i64: 128, 128>}, {pipeline_mode = #tpu.pipeline_mode<synchronous>, transform_indices = @transform_6, window_bounds = array<i64: 1, 128>}, {pipeline_mode = #tpu.pipeline_mode<synchronous>, transform_indices = @transform_7, window_bounds = array<i64: 128, 128>}, {pipeline_mode = #tpu.pipeline_mode<synchronous>, transform_indices = @transform_8, window_bounds = array<i64: 1, 128>}, {pipeline_mode = #tpu.pipeline_mode<synchronous>, transform_indices = @transform_9, window_bounds = array<i64: 128, 128>}, {transform_indices = @transform_10, window_bounds = array<i64: 8, 128>}]} {
    %c0 = arith.constant 0 : index
    %c0_0 = arith.constant 0 : index
    %0 = vector.load %arg3[%c0, %c0_0] : memref<16x128xf32, #tpu.memory_space<vmem>>, vector<16x128xf32>
    %c0_1 = arith.constant 0 : index
    %c0_2 = arith.constant 0 : index
    %1 = vector.load %arg4[%c0_1, %c0_2] : memref<16x128xf32, #tpu.memory_space<vmem>>, vector<16x128xf32>
    %c0_3 = arith.constant 0 : index
    %c0_4 = arith.constant 0 : index
    %2 = vector.load %arg5[%c0_3, %c0_4] : memref<1x128xf32, #tpu.memory_space<vmem>>, vector<1x128xf32>
    %c0_5 = arith.constant 0 : index
    %c0_6 = arith.constant 0 : index
    %3 = vector.load %arg1[%c0_5, %c0_6] : memref<8x16xf32, #tpu.memory_space<vmem>>, vector<8x16xf32>
    %cst = arith.constant dense<0.000000e+00> : vector<8x128xf32>
    %4 = tpu.matmul %3, %0, %cst {dimension_numbers = #tpu.dot_dimension_numbers<[1], [0], [0], [1], [0, 0, 1, 1], [], []>} : vector<8x16xf32>, vector<16x128xf32>, vector<8x128xf32> -> vector<8x128xf32>
    %5 = vector.broadcast %2 : vector<1x128xf32> to vector<8x128xf32>
    %6 = arith.addf %5, %4 : vector<8x128xf32>
    %c0_7 = arith.constant 0 : index
    %c0_8 = arith.constant 0 : index
    %7 = vector.load %arg2[%c0_7, %c0_8] : memref<8x16xf32, #tpu.memory_space<vmem>>, vector<8x16xf32>
    %cst_9 = arith.constant dense<0.000000e+00> : vector<8x128xf32>
    %8 = tpu.matmul %7, %1, %cst_9 {dimension_numbers = #tpu.dot_dimension_numbers<[1], [0], [0], [1], [0, 0, 1, 1], [], []>} : vector<8x16xf32>, vector<16x128xf32>, vector<8x128xf32> -> vector<8x128xf32>
    %9 = arith.addf %6, %8 : vector<8x128xf32>
    %10 = math.tanh %9 : vector<8x128xf32>
    %c0_10 = arith.constant 0 : index
    %c0_11 = arith.constant 0 : index
    %11 = vector.load %arg6[%c0_10, %c0_11] : memref<128x128xf32, #tpu.memory_space<vmem>>, vector<128x128xf32>
    %c0_12 = arith.constant 0 : index
    %c0_13 = arith.constant 0 : index
    %12 = vector.load %arg7[%c0_12, %c0_13] : memref<1x128xf32, #tpu.memory_space<vmem>>, vector<1x128xf32>
    %cst_14 = arith.constant dense<0.000000e+00> : vector<8x128xf32>
    %13 = tpu.matmul %10, %11, %cst_14 {dimension_numbers = #tpu.dot_dimension_numbers<[1], [0], [0], [1], [0, 0, 1, 1], [], []>} : vector<8x128xf32>, vector<128x128xf32>, vector<8x128xf32> -> vector<8x128xf32>
    %14 = vector.broadcast %12 : vector<1x128xf32> to vector<8x128xf32>
    %15 = arith.addf %14, %13 : vector<8x128xf32>
    %16 = math.tanh %15 : vector<8x128xf32>
    %c0_15 = arith.constant 0 : index
    %c0_16 = arith.constant 0 : index
    %17 = vector.load %arg8[%c0_15, %c0_16] : memref<128x128xf32, #tpu.memory_space<vmem>>, vector<128x128xf32>
    %c0_17 = arith.constant 0 : index
    %c0_18 = arith.constant 0 : index
    %18 = vector.load %arg9[%c0_17, %c0_18] : memref<1x128xf32, #tpu.memory_space<vmem>>, vector<1x128xf32>
    %cst_19 = arith.constant dense<0.000000e+00> : vector<8x128xf32>
    %19 = tpu.matmul %16, %17, %cst_19 {dimension_numbers = #tpu.dot_dimension_numbers<[1], [0], [0], [1], [0, 0, 1, 1], [], []>} : vector<8x128xf32>, vector<128x128xf32>, vector<8x128xf32> -> vector<8x128xf32>
    %20 = vector.broadcast %18 : vector<1x128xf32> to vector<8x128xf32>
    %21 = arith.addf %20, %19 : vector<8x128xf32>
    %cst_20 = arith.constant dense<0xFF800000> : vector<8xf32>
    %22 = vector.multi_reduction <maximumf>, %21, %cst_20 [1] : vector<8x128xf32> to vector<8xf32>
    %23 = vector.shape_cast %22 : vector<8xf32> to vector<8x1xf32>
    %24 = vector.broadcast %23 : vector<8x1xf32> to vector<8x128xf32>
    %25 = arith.subf %21, %24 : vector<8x128xf32>
    %26 = math.exp %25 : vector<8x128xf32>
    %c0_21 = arith.constant 0 : index
    %c0_22 = arith.constant 0 : index
    %27 = vector.load %arg10[%c0_21, %c0_22] : memref<128x128xf32, #tpu.memory_space<vmem>>, vector<128x128xf32>
    %cst_23 = arith.constant dense<0.000000e+00> : vector<8x128xf32>
    %28 = tpu.matmul %26, %27, %cst_23 {dimension_numbers = #tpu.dot_dimension_numbers<[1], [0], [0], [1], [0, 0, 1, 1], [], []>} : vector<8x128xf32>, vector<128x128xf32>, vector<8x128xf32> -> vector<8x128xf32>
    %cst_24 = arith.constant 1.000000e-30 : f32
    %29 = vector.broadcast %cst_24 : f32 to vector<8x128xf32>
    %30 = arith.maximumf %28, %29 : vector<8x128xf32>
    %31 = tpu.reciprocal %30 {approx = true} : vector<8x128xf32> -> vector<8x128xf32>
    %32 = arith.mulf %26, %31 : vector<8x128xf32>
    %c0_25 = arith.constant 0 : index
    %c0_26 = arith.constant 0 : index
    %33 = vector.load %arg11[%c0_25, %c0_26] : memref<8x128xf32, #tpu.memory_space<vmem>>, vector<8x128xf32>
    tpu.vector_store %arg11[%c0_25, %c0_26], %32 {strides = array<i32>} : memref<8x128xf32, #tpu.memory_space<vmem>>, vector<8x128xf32>,
    return
  }
  func.func @transform_0(%arg0: i32) -> (i32, i32) {
    %c0_i32 = arith.constant 0 : i32
    %c0_i32_0 = arith.constant 0 : i32
    return %arg0, %c0_i32 : i32, i32
  }
  func.func @transform_1(%arg0: i32) -> (i32, i32) {
    %c0_i32 = arith.constant 0 : i32
    %c0_i32_0 = arith.constant 0 : i32
    return %arg0, %c0_i32 : i32, i32
  }
  func.func @transform_2(%arg0: i32) -> (i32, i32) {
    %c0_i32 = arith.constant 0 : i32
    %c0_i32_0 = arith.constant 0 : i32
    %c0_i32_1 = arith.constant 0 : i32
    return %c0_i32, %c0_i32_0 : i32, i32
  }
  func.func @transform_3(%arg0: i32) -> (i32, i32) {
    %c0_i32 = arith.constant 0 : i32
    %c0_i32_0 = arith.constant 0 : i32
    %c0_i32_1 = arith.constant 0 : i32
    return %c0_i32, %c0_i32_0 : i32, i32
  }
  func.func @transform_4(%arg0: i32) -> (i32, i32) {
    %c0_i32 = arith.constant 0 : i32
    %c0_i32_0 = arith.constant 0 : i32
    %c0_i32_1 = arith.constant 0 : i32
    return %c0_i32, %c0_i32_0 : i32, i32
  }
  func.func @transform_5(%arg0: i32) -> (i32, i32) {
    %c0_i32 = arith.constant 0 : i32
    %c0_i32_0 = arith.constant 0 : i32
    %c0_i32_1 = arith.constant 0 : i32
    return %c0_i32, %c0_i32_0 : i32, i32
  }
  func.func @transform_6(%arg0: i32) -> (i32, i32) {
    %c0_i32 = arith.constant 0 : i32
    %c0_i32_0 = arith.constant 0 : i32
    %c0_i32_1 = arith.constant 0 : i32
    return %c0_i32, %c0_i32_0 : i32, i32
  }
  func.func @transform_7(%arg0: i32) -> (i32, i32) {
    %c0_i32 = arith.constant 0 : i32
    %c0_i32_0 = arith.constant 0 : i32
    %c0_i32_1 = arith.constant 0 : i32
    return %c0_i32, %c0_i32_0 : i32, i32
  }
  func.func @transform_8(%arg0: i32) -> (i32, i32) {
    %c0_i32 = arith.constant 0 : i32
    %c0_i32_0 = arith.constant 0 : i32
    %c0_i32_1 = arith.constant 0 : i32
    return %c0_i32, %c0_i32_0 : i32, i32
  }
  func.func @transform_9(%arg0: i32) -> (i32, i32) {
    %c0_i32 = arith.constant 0 : i32
    %c0_i32_0 = arith.constant 0 : i32
    %c0_i32_1 = arith.constant 0 : i32
    return %c0_i32, %c0_i32_0 : i32, i32
  }
  func.func @transform_10(%arg0: i32) -> (i32, i32) {
    %c0_i32 = arith.constant 0 : i32
    %c0_i32_0 = arith.constant 0 : i32
    return %arg0, %c0_i32 : i32, i32
  }
}

</mosaic_0001>

<llo_original>
// kernel: tpu_custom_call.1
$region0: #{tpu_custom_call.1}
  #allocation0 [shape = 'u32[]', space=smem, size = 0x4, offset = 0x4, fixed_abs, tag = 'smem constant byte address 0x4 - core index']
  #allocation1 [shape = 'u32[144,128]{1,0:T(1,128)}', space=vmem, size = 0x12000, scoped, tag = 'internal scratch']
  %s0 = inlined_call_operand.hbm [shape: f32[8,16], index: 0, kind: input, shape index: {}]
  %s1 = inlined_call_operand.hbm [shape: f32[8,16], index: 1, kind: input, shape index: {}]
  %s2 = inlined_call_operand.hbm [shape: f32[16,128], index: 2, kind: input, shape index: {}]
  %s3 = inlined_call_operand.hbm [shape: f32[16,128], index: 3, kind: input, shape index: {}]
  %s4 = inlined_call_operand.vmem [shape: f32[1,128], index: 4, kind: input, shape index: {}]
  %s5 = inlined_call_operand.hbm [shape: f32[128,128], index: 5, kind: input, shape index: {}]
  %s6 = inlined_call_operand.vmem [shape: f32[1,128], index: 6, kind: input, shape index: {}]
  %s7 = inlined_call_operand.hbm [shape: f32[128,128], index: 7, kind: input, shape index: {}]
  %s8 = inlined_call_operand.vmem [shape: f32[1,128], index: 8, kind: input, shape index: {}]
  %s9 = inlined_call_operand.hbm [shape: f32[128,128], index: 9, kind: input, shape index: {}]
  %s10 = inlined_call_operand.hbm [shape: f32[8,128], index: 10, kind: output, shape index: {}]
  %s11 = sld [smem:[#allocation0]]
  $region78: #{tpu_custom_call.1} parent=0
    _
  %s13 = ssub.s32 1, %s11
  %s14 = scalar_select 0, %s13, %s11
  $region1: #{tpu_custom_call.1} parent=0
    #allocation2 [shape = 'u8[4096]{0}', space=vmem, size = 0x1000, scoped, tag = 'input window, operand 0, single buffered']
    #allocation3 [shape = 's32[1]{0}', space=sflag, size = 0x4, scoped, tag = 'scoped memory for tpu_custom_call.1']
    #allocation4 [shape = 's32[1]{0}', space=sflag, size = 0x4, scoped, tag = 'scoped memory for tpu_custom_call.1']
    #allocation5 [shape = 'u8[4096]{0}', space=vmem, size = 0x1000, scoped, tag = 'input window, operand 1, single buffered']
    #allocation6 [shape = 's32[1]{0}', space=sflag, size = 0x4, scoped, tag = 'scoped memory for tpu_custom_call.1']
    #allocation7 [shape = 'u8[8192]{0}', space=vmem, size = 0x2000, scoped, tag = 'input window, operand 2, single buffered']
    #allocation8 [shape = 'u8[8192]{0}', space=vmem, size = 0x2000, scoped, tag = 'input window, operand 3, single buffered']
    #allocation9 [shape = 's32[1]{0}', space=sflag, size = 0x4, scoped, tag = 'scoped memory for tpu_custom_call.1']
    #allocation10 [shape = 'u8[65536]{0}', space=vmem, size = 0x10000, scoped, tag = 'input window, operand 5, single buffered']
    #allocation11 [shape = 'u8[65536]{0}', space=vmem, size = 0x10000, scoped, tag = 'input window, operand 7, single buffered']
    #allocation12 [shape = 's32[1]{0}', space=sflag, size = 0x4, scoped, tag = 'scoped memory for tpu_custom_call.1']
    #allocation13 [shape = 'u8[65536]{0}', space=vmem, size = 0x10000, scoped, tag = 'input window, operand 9, single buffered']
    #allocation14 [shape = 'u8[4096]{0}', space=vmem, size = 0x1000, scoped, tag = 'output window, operand 0, single buffered']
    %15 = vsyncpa [#allocation3], 0
    %16 = vsyncpa [#allocation6], 0
    %17 = vsyncpa [#allocation9], 0
    %18 = vsyncpa [#allocation12], 0
    %19 = vsyncpa [#allocation4], 0
    // Predicated region
    $region2: #{tpu_custom_call.1} parent=1 // pred_check
      _
    $region3: #{tpu_custom_call.1} parent=1 // pred_check_branch
      %21 = sbr.rel (0) target = $region5
    $region4: #{tpu_custom_call.1} parent=1 // pred_region
      %s23 = ssub.s32 128, 128
      %24 = vsyncadd [#allocation3], %s23
      %s26 = sshll.u32 [#allocation2], 4
      %s27 = int_to_ptr.vmem [resolvable:$true] %s26
      %29 = dma.hbm_to_vmem [thread:$0]  %s0, 128, %s27, [#allocation3]
    $region5: #{tpu_custom_call.1} parent=1 // pred_fallthru
      _
    // Predicated region
    $region6: #{tpu_custom_call.1} parent=1 // pred_check
      _
    $region7: #{tpu_custom_call.1} parent=1 // pred_check_branch
      %31 = sbr.rel (0) target = $region9
    $region8: #{tpu_custom_call.1} parent=1 // pred_region
      %s33 = ssub.s32 128, 128
      %34 = vsyncadd [#allocation6], %s33
      %s36 = sshll.u32 [#allocation5], 4
      %s37 = int_to_ptr.vmem [resolvable:$true] %s36
      %39 = dma.hbm_to_vmem [thread:$0]  %s1, 128, %s37, [#allocation6]
    $region9: #{tpu_custom_call.1} parent=1 // pred_fallthru
      _
    // Predicated region
    $region10: #{tpu_custom_call.1} parent=1 // pred_check
      _
    $region11: #{tpu_custom_call.1} parent=1 // pred_check_branch
      %41 = sbr.rel (0) target = $region13
    $region12: #{tpu_custom_call.1} parent=1 // pred_region
      %s43 = ssub.s32 256, 256
      %44 = vsyncadd [#allocation6], %s43
      %s45 = sshll.u32 [#allocation7], 4
      %s46 = int_to_ptr.vmem [resolvable:$true] %s45
      %51 = dma.hbm_to_vmem [thread:$0]  %s2, 256, %s46, [#allocation6], 128, 128, 8
    $region13: #{tpu_custom_call.1} parent=1 // pred_fallthru
      _
    // Predicated region
    $region14: #{tpu_custom_call.1} parent=1 // pred_check
      _
    $region15: #{tpu_custom_call.1} parent=1 // pred_check_branch
      %53 = sbr.rel (0) target = $region17
    $region16: #{tpu_custom_call.1} parent=1 // pred_region
      %s55 = ssub.s32 256, 256
      %56 = vsyncadd [#allocation9], %s55
      %s57 = sshll.u32 [#allocation8], 4
      %s58 = int_to_ptr.vmem [resolvable:$true] %s57
      %63 = dma.hbm_to_vmem [thread:$0]  %s3, 256, %s58, [#allocation9], 128, 128, 8
    $region17: #{tpu_custom_call.1} parent=1 // pred_fallthru
      _
    // Predicated region
    $region18: #{tpu_custom_call.1} parent=1 // pred_check
      _
    $region19: #{tpu_custom_call.1} parent=1 // pred_check_branch
      %65 = sbr.rel (0) target = $region21
    $region20: #{tpu_custom_call.1} parent=1 // pred_region
      _
    $region21: #{tpu_custom_call.1} parent=1 // pred_fallthru
      _
    // Predicated region
    $region22: #{tpu_custom_call.1} parent=1 // pred_check
      _
    $region23: #{tpu_custom_call.1} parent=1 // pred_check_branch
      %67 = sbr.rel (0) target = $region25
    $region24: #{tpu_custom_call.1} parent=1 // pred_region
      %s69 = ssub.s32 2048, 2048
      %70 = vsyncadd [#allocation9], %s69
      %s71 = sshll.u32 [#allocation10], 4
      %s72 = int_to_ptr.vmem [resolvable:$true] %s71
      %77 = dma.hbm_to_vmem [thread:$0]  %s5, 2048, %s72, [#allocation9], 128, 128, 8
    $region25: #{tpu_custom_call.1} parent=1 // pred_fallthru
      _
    // Predicated region
    $region26: #{tpu_custom_call.1} parent=1 // pred_check
      _
    $region27: #{tpu_custom_call.1} parent=1 // pred_check_branch
      %79 = sbr.rel (0) target = $region29
    $region28: #{tpu_custom_call.1} parent=1 // pred_region
      _
    $region29: #{tpu_custom_call.1} parent=1 // pred_fallthru
      _
    // Predicated region
    $region30: #{tpu_custom_call.1} parent=1 // pred_check
      _
    $region31: #{tpu_custom_call.1} parent=1 // pred_check_branch
      %81 = sbr.rel (0) target = $region33
    $region32: #{tpu_custom_call.1} parent=1 // pred_region
      %s83 = ssub.s32 2048, 2048
      %84 = vsyncadd [#allocation12], %s83
      %s85 = sshll.u32 [#allocation11], 4
      %s86 = int_to_ptr.vmem [resolvable:$true] %s85
      %91 = dma.hbm_to_vmem [thread:$0]  %s7, 2048, %s86, [#allocation12], 128, 128, 8
    $region33: #{tpu_custom_call.1} parent=1 // pred_fallthru
      _
    // Predicated region
    $region34: #{tpu_custom_call.1} parent=1 // pred_check
      _
    $region35: #{tpu_custom_call.1} parent=1 // pred_check_branch
      %93 = sbr.rel (0) target = $region37
    $region36: #{tpu_custom_call.1} parent=1 // pred_region
      _
    $region37: #{tpu_custom_call.1} parent=1 // pred_fallthru
      _
    // Predicated region
    $region38: #{tpu_custom_call.1} parent=1 // pred_check
      _
    $region39: #{tpu_custom_call.1} parent=1 // pred_check_branch
      %95 = sbr.rel (0) target = $region41
    $region40: #{tpu_custom_call.1} parent=1 // pred_region
      %s97 = ssub.s32 2048, 2048
      %98 = vsyncadd [#allocation12], %s97
      %s99 = sshll.u32 [#allocation13], 4
      %s100 = int_to_ptr.vmem [resolvable:$true] %s99
      %105 = dma.hbm_to_vmem [thread:$0]  %s9, 2048, %s100, [#allocation12], 128, 128, 8
    $region41: #{tpu_custom_call.1} parent=1 // pred_fallthru
      _
    // Predicated region
    $region42: #{tpu_custom_call.1} parent=1 // pred_check
      _
    $region43: #{tpu_custom_call.1} parent=1 // pred_check_branch
      %107 = sbr.rel (0) target = $region45
    $region44: #{tpu_custom_call.1} parent=1 // pred_region
      %108 = dma.done [#allocation3], 128
    $region45: #{tpu_custom_call.1} parent=1 // pred_fallthru
      _
    // Predicated region
    $region46: #{tpu_custom_call.1} parent=1 // pred_check
      _
    $region47: #{tpu_custom_call.1} parent=1 // pred_check_branch
      %110 = sbr.rel (0) target = $region49
    $region48: #{tpu_custom_call.1} parent=1 // pred_region
      %111 = dma.done [#allocation6], 128
    $region49: #{tpu_custom_call.1} parent=1 // pred_fallthru
      _
    // Predicated region
    $region50: #{tpu_custom_call.1} parent=1 // pred_check
      _
    $region51: #{tpu_custom_call.1} parent=1 // pred_check_branch
      %113 = sbr.rel (0) target = $region53
    $region52: #{tpu_custom_call.1} parent=1 // pred_region
      %114 = dma.done [#allocation6], 256
    $region53: #{tpu_custom_call.1} parent=1 // pred_fallthru
      _
    // Predicated region
    $region54: #{tpu_custom_call.1} parent=1 // pred_check
      _
    $region55: #{tpu_custom_call.1} parent=1 // pred_check_branch
      %116 = sbr.rel (0) target = $region57
    $region56: #{tpu_custom_call.1} parent=1 // pred_region
      %117 = dma.done [#allocation9], 256
    $region57: #{tpu_custom_call.1} parent=1 // pred_fallthru
      _
    // Predicated region
    $region58: #{tpu_custom_call.1} parent=1 // pred_check
      _
    $region59: #{tpu_custom_call.1} parent=1 // pred_check_branch
      %119 = sbr.rel (0) target = $region61
    $region60: #{tpu_custom_call.1} parent=1 // pred_region
      %120 = dma.done [#allocation9], 2048
    $region61: #{tpu_custom_call.1} parent=1 // pred_fallthru
      _
    // Predicated region
    $region62: #{tpu_custom_call.1} parent=1 // pred_check
      _
    $region63: #{tpu_custom_call.1} parent=1 // pred_check_branch
      %122 = sbr.rel (0) target = $region65
    $region64: #{tpu_custom_call.1} parent=1 // pred_region
      %123 = dma.done [#allocation12], 2048
    $region65: #{tpu_custom_call.1} parent=1 // pred_fallthru
      _
    // Predicated region
    $region66: #{tpu_custom_call.1} parent=1 // pred_check
      _
    $region67: #{tpu_custom_call.1} parent=1 // pred_check_branch
      %125 = sbr.rel (0) target = $region69
    $region68: #{tpu_custom_call.1} parent=1 // pred_region
      %126 = dma.done [#allocation12], 2048
    $region69: #{tpu_custom_call.1} parent=1 // pred_fallthru
      _
    %v127 = vld [vmem:[#allocation7] sm:$0xff]
    %v128 = vld [vmem:[#allocation7 + $0x8] sm:$0xff]
    %v129 = vld [vmem:[#allocation8] sm:$0xff]
    %v130 = vld [vmem:[#allocation8 + $0x8] sm:$0xff]
    %v131 = vld [vmem:[%s4] sm:$0x1]
    %v132 = vld [vmem:[#allocation2] sm:$0xff]
    %vm133 = vcmask 130048
    %v135 = vsel %vm133, %v132, 0
    %137 = vmatprep.subr.mxu0 0.0
    %138 = vmatpush1.msra.mxu0 %v127
    %139 = vmatprep.subr.mxu0 0.0
    %140 = vmatpush1.msra.mxu0 %v128
    %141 = vmatprep.subr.mxu0 0.0
    %142 = vmatpush1.msra.mxu0 0.0
    %143 = vmatprep.subr.mxu0 0.0
    %144 = vmatpush1.msra.mxu0 0.0
    %145 = vmatprep.subr.mxu0 0.0
    %146 = vmatpush1.msra.mxu0 0.0
    %147 = vmatprep.subr.mxu0 0.0
    %148 = vmatpush1.msra.mxu0 0.0
    %149 = vmatprep.subr.mxu0 0.0
    %150 = vmatpush1.msra.mxu0 0.0
    %151 = vmatprep.subr.mxu0 0.0
    %152 = vmatpush1.msra.mxu0 0.0
    %153 = vmatprep.subr.mxu0 0.0
    %154 = vmatpush1.msra.mxu0 0.0
    %155 = vmatprep.subr.mxu0 0.0
    %156 = vmatpush1.msra.mxu0 0.0
    %157 = vmatprep.subr.mxu0 0.0
    %158 = vmatpush1.msra.mxu0 0.0
    %159 = vmatprep.subr.mxu0 0.0
    %160 = vmatpush1.msra.mxu0 0.0
    %161 = vmatprep.subr.mxu0 0.0
    %162 = vmatpush1.msra.mxu0 0.0
    %163 = vmatprep.subr.mxu0 0.0
    %164 = vmatpush1.msra.mxu0 0.0
    %165 = vmatprep.subr.mxu0 0.0
    %166 = vmatpush1.msra.mxu0 0.0
    %167 = vmatprep.subr.mxu0 0.0
    %168 = vmatpush1.msra.mxu0 0.0
    %169 = vmatprep.subr.mxu0 0.0
    %170 = vmatpush1.msra.mxu0 0.0
    %171 = vmatprep.subr.mxu0 0.0
    %172 = vmatpush1.msra.mxu0 0.0
    %173 = vmatprep.subr.mxu0 0.0
    %174 = vmatpush1.msra.mxu0 0.0
    %175 = vmatprep.subr.mxu0 0.0
    %176 = vmatpush1.msra.mxu0 0.0
    %177 = vmatprep.subr.mxu0 0.0
    %178 = vmatpush1.msra.mxu0 0.0
    %179 = vmatprep.subr.mxu0 0.0
    %180 = vmatpush1.msra.mxu0 0.0
    %181 = vmatprep.subr.mxu0 0.0
    %182 = vmatpush1.msra.mxu0 0.0
    %183 = vmatprep.subr.mxu0 0.0
    %184 = vmatpush1.msra.mxu0 0.0
    %185 = vmatprep.subr.mxu0 0.0
    %186 = vmatpush1.msra.mxu0 0.0
    %187 = vmatprep.subr.mxu0 0.0
    %188 = vmatpush1.msra.mxu0 0.0
    %189 = vmatprep.subr.mxu0 0.0
    %190 = vmatpush1.msra.mxu0 0.0
    %191 = vmatprep.subr.mxu0 0.0
    %192 = vmatpush1.msra.mxu0 0.0
    %193 = vmatprep.subr.mxu0 0.0
    %194 = vmatpush1.msra.mxu0 0.0
    %195 = vmatprep.subr.mxu0 0.0
    %196 = vmatpush1.msra.mxu0 0.0
    %197 = vmatprep.subr.mxu0 0.0
    %198 = vmatpush1.msra.mxu0 0.0
    %199 = vmatprep.subr.mxu0 0.0
    %200 = vmatpush1.msra.mxu0 0.0
    %201 = vmatprep.mubr.f32.mxu0 0.0
    %202 = vmatmul.mubr.f32.gmra.mrb[0].mxu0 %v135
    %v203 = vpop.f32.mrb[0].mxu0
    %v204 = vadd.f32 0.0, %v203
    %v205 = vpop.f32.mrb[0].mxu0
    %206 = vdwg.mxu0
    %v208 = vlaneseq
    %v209 = vshrl.u32 %v208, 7
    %v210 = vsub.s32 0, %v209
    %v211 = vrot.slane %v131, %v210
    %v213 = vadd.f32 %v211, %v204
    %v214 = vld [vmem:[#allocation5] sm:$0xff]
    %v216 = vsel %vm133, %v214, 0
    %218 = vmatprep.subr.mxu0 0.0
    %219 = vmatpush1.msra.mxu0 %v129
    %220 = vmatprep.subr.mxu0 0.0
    %221 = vmatpush1.msra.mxu0 %v130
    %222 = vmatprep.subr.mxu0 0.0
    %223 = vmatpush1.msra.mxu0 0.0
    %224 = vmatprep.subr.mxu0 0.0
    %225 = vmatpush1.msra.mxu0 0.0
    %226 = vmatprep.subr.mxu0 0.0
    %227 = vmatpush1.msra.mxu0 0.0
    %228 = vmatprep.subr.mxu0 0.0
    %229 = vmatpush1.msra.mxu0 0.0
    %230 = vmatprep.subr.mxu0 0.0
    %231 = vmatpush1.msra.mxu0 0.0
    %232 = vmatprep.subr.mxu0 0.0
    %233 = vmatpush1.msra.mxu0 0.0
    %234 = vmatprep.subr.mxu0 0.0
    %235 = vmatpush1.msra.mxu0 0.0
    %236 = vmatprep.subr.mxu0 0.0
    %237 = vmatpush1.msra.mxu0 0.0
    %238 = vmatprep.subr.mxu0 0.0
    %239 = vmatpush1.msra.mxu0 0.0
    %240 = vmatprep.subr.mxu0 0.0
    %241 = vmatpush1.msra.mxu0 0.0
    %242 = vmatprep.subr.mxu0 0.0
    %243 = vmatpush1.msra.mxu0 0.0
    %244 = vmatprep.subr.mxu0 0.0
    %245 = vmatpush1.msra.mxu0 0.0
    %246 = vmatprep.subr.mxu0 0.0
    %247 = vmatpush1.msra.mxu0 0.0
    %248 = vmatprep.subr.mxu0 0.0
    %249 = vmatpush1.msra.mxu0 0.0
    %250 = vmatprep.subr.mxu0 0.0
    %251 = vmatpush1.msra.mxu0 0.0
    %252 = vmatprep.subr.mxu0 0.0
    %253 = vmatpush1.msra.mxu0 0.0
    %254 = vmatprep.subr.mxu0 0.0
    %255 = vmatpush1.msra.mxu0 0.0
    %256 = vmatprep.subr.mxu0 0.0
    %257 = vmatpush1.msra.mxu0 0.0
    %258 = vmatprep.subr.mxu0 0.0
    %259 = vmatpush1.msra.mxu0 0.0
    %260 = vmatprep.subr.mxu0 0.0
    %261 = vmatpush1.msra.mxu0 0.0
    %262 = vmatprep.subr.mxu0 0.0
    %263 = vmatpush1.msra.mxu0 0.0
    %264 = vmatprep.subr.mxu0 0.0
    %265 = vmatpush1.msra.mxu0 0.0
    %266 = vmatprep.subr.mxu0 0.0
    %267 = vmatpush1.msra.mxu0 0.0
    %268 = vmatprep.subr.mxu0 0.0
    %269 = vmatpush1.msra.mxu0 0.0
    %270 = vmatprep.subr.mxu0 0.0
    %271 = vmatpush1.msra.mxu0 0.0
    %272 = vmatprep.subr.mxu0 0.0
    %273 = vmatpush1.msra.mxu0 0.0
    %274 = vmatprep.subr.mxu0 0.0
    %275 = vmatpush1.msra.mxu0 0.0
    %276 = vmatprep.subr.mxu0 0.0
    %277 = vmatpush1.msra.mxu0 0.0
    %278 = vmatprep.subr.mxu0 0.0
    %279 = vmatpush1.msra.mxu0 0.0
    %280 = vmatprep.subr.mxu0 0.0
    %281 = vmatpush1.msra.mxu0 0.0
    %282 = vmatprep.mubr.f32.mxu0 0.0
    %283 = vmatmul.mubr.f32.gmra.mrb[0].mxu0 %v216
    %v284 = vpop.f32.mrb[0].mxu0
    %v285 = vadd.f32 0.0, %v284
    %v286 = vpop.f32.mrb[0].mxu0
    %287 = vdwg.mxu0
    %v288 = vadd.f32 %v213, %v285
    %v289 = vtanh.pop %v288
    %v290 = vld [vmem:[#allocation10] sm:$0xff]
    %v291 = vld [vmem:[#allocation10 + $0x8] sm:$0xff]
    %v292 = vld [vmem:[#allocation10 + $0x10] sm:$0xff]
    %v293 = vld [vmem:[#allocation10 + $0x18] sm:$0xff]
    %v294 = vld [vmem:[#allocation10 + $0x20] sm:$0xff]
    %v295 = vld [vmem:[#allocation10 + $0x28] sm:$0xff]
    %v296 = vld [vmem:[#allocation10 + $0x30] sm:$0xff]
    %v297 = vld [vmem:[#allocation10 + $0x38] sm:$0xff]
    %v298 = vld [vmem:[#allocation10 + $0x40] sm:$0xff]
    %v299 = vld [vmem:[#allocation10 + $0x48] sm:$0xff]
    %v300 = vld [vmem:[#allocation10 + $0x50] sm:$0xff]
    %v301 = vld [vmem:[#allocation10 + $0x58] sm:$0xff]
    %v302 = vld [vmem:[#allocation10 + $0x60] sm:$0xff]
    %v303 = vld [vmem:[#allocation10 + $0x68] sm:$0xff]
    %v304 = vld [vmem:[#allocation10 + $0x70] sm:$0xff]
    %v305 = vld [vmem:[#allocation10 + $0x78] sm:$0xff]
    %v306 = vld [vmem:[%s6] sm:$0x1]
    %307 = vmatprep.subr.mxu0 0.0
    %308 = vmatpush1.msra.mxu0 %v290
    %309 = vmatprep.subr.mxu0 0.0
    %310 = vmatpush1.msra.mxu0 %v291
    %311 = vmatprep.subr.mxu0 0.0
    %312 = vmatpush1.msra.mxu0 %v292
    %313 = vmatprep.subr.mxu0 0.0
    %314 = vmatpush1.msra.mxu0 %v293
    %315 = vmatprep.subr.mxu0 0.0
    %316 = vmatpush1.msra.mxu0 %v294
    %317 = vmatprep.subr.mxu0 0.0
    %318 = vmatpush1.msra.mxu0 %v295
    %319 = vmatprep.subr.mxu0 0.0
    %320 = vmatpush1.msra.mxu0 %v296
    %321 = vmatprep.subr.mxu0 0.0
    %322 = vmatpush1.msra.mxu0 %v297
    %323 = vmatprep.subr.mxu0 0.0
    %324 = vmatpush1.msra.mxu0 %v298
    %325 = vmatprep.subr.mxu0 0.0
    %326 = vmatpush1.msra.mxu0 %v299
    %327 = vmatprep.subr.mxu0 0.0
    %328 = vmatpush1.msra.mxu0 %v300
    %329 = vmatprep.subr.mxu0 0.0
    %330 = vmatpush1.msra.mxu0 %v301
    %331 = vmatprep.subr.mxu0 0.0
    %332 = vmatpush1.msra.mxu0 %v302
    %333 = vmatprep.subr.mxu0 0.0
    %334 = vmatpush1.msra.mxu0 %v303
    %335 = vmatprep.subr.mxu0 0.0
    %336 = vmatpush1.msra.mxu0 %v304
    %337 = vmatprep.subr.mxu0 0.0
    %338 = vmatpush1.msra.mxu0 %v305
    %339 = vmatprep.subr.mxu0 0.0
    %340 = vmatpush1.msra.mxu0 0.0
    %341 = vmatprep.subr.mxu0 0.0
    %342 = vmatpush1.msra.mxu0 0.0
    %343 = vmatprep.subr.mxu0 0.0
    %344 = vmatpush1.msra.mxu0 0.0
    %345 = vmatprep.subr.mxu0 0.0
    %346 = vmatpush1.msra.mxu0 0.0
    %347 = vmatprep.subr.mxu0 0.0
    %348 = vmatpush1.msra.mxu0 0.0
    %349 = vmatprep.subr.mxu0 0.0
    %350 = vmatpush1.msra.mxu0 0.0
    %351 = vmatprep.subr.mxu0 0.0
    %352 = vmatpush1.msra.mxu0 0.0
    %353 = vmatprep.subr.mxu0 0.0
    %354 = vmatpush1.msra.mxu0 0.0
    %355 = vmatprep.subr.mxu0 0.0
    %356 = vmatpush1.msra.mxu0 0.0
    %357 = vmatprep.subr.mxu0 0.0
    %358 = vmatpush1.msra.mxu0 0.0
    %359 = vmatprep.subr.mxu0 0.0
    %360 = vmatpush1.msra.mxu0 0.0
    %361 = vmatprep.subr.mxu0 0.0
    %362 = vmatpush1.msra.mxu0 0.0
    %363 = vmatprep.subr.mxu0 0.0
    %364 = vmatpush1.msra.mxu0 0.0
    %365 = vmatprep.subr.mxu0 0.0
    %366 = vmatpush1.msra.mxu0 0.0
    %367 = vmatprep.subr.mxu0 0.0
    %368 = vmatpush1.msra.mxu0 0.0
    %369 = vmatprep.subr.mxu0 0.0
    %370 = vmatpush1.msra.mxu0 0.0
    %371 = vmatprep.mubr.f32.mxu0 0.0
    %372 = vmatmul.mubr.f32.gmra.mrb[0].mxu0 %v289
    %v373 = vpop.f32.mrb[0].mxu0
    %v374 = vadd.f32 0.0, %v373
    %v375 = vpop.f32.mrb[0].mxu0
    %376 = vdwg.mxu0
    %v378 = vlaneseq
    %v379 = vshrl.u32 %v378, 7
    %v380 = vsub.s32 0, %v379
    %v381 = vrot.slane %v306, %v380
    %v383 = vadd.f32 %v381, %v374
    %v384 = vtanh.pop %v383
    %v385 = vld [vmem:[#allocation11] sm:$0xff]
    %v386 = vld [vmem:[#allocation11 + $0x8] sm:$0xff]
    %v387 = vld [vmem:[#allocation11 + $0x10] sm:$0xff]
    %v388 = vld [vmem:[#allocation11 + $0x18] sm:$0xff]
    %v389 = vld [vmem:[#allocation11 + $0x20] sm:$0xff]
    %v390 = vld [vmem:[#allocation11 + $0x28] sm:$0xff]
    %v391 = vld [vmem:[#allocation11 + $0x30] sm:$0xff]
    %v392 = vld [vmem:[#allocation11 + $0x38] sm:$0xff]
    %v393 = vld [vmem:[#allocation11 + $0x40] sm:$0xff]
    %v394 = vld [vmem:[#allocation11 + $0x48] sm:$0xff]
    %v395 = vld [vmem:[#allocation11 + $0x50] sm:$0xff]
    %v396 = vld [vmem:[#allocation11 + $0x58] sm:$0xff]
    %v397 = vld [vmem:[#allocation11 + $0x60] sm:$0xff]
    %v398 = vld [vmem:[#allocation11 + $0x68] sm:$0xff]
    %v399 = vld [vmem:[#allocation11 + $0x70] sm:$0xff]
    %v400 = vld [vmem:[#allocation11 + $0x78] sm:$0xff]
    %v401 = vld [vmem:[%s8] sm:$0x1]
    %402 = vmatprep.subr.mxu0 0.0
    %403 = vmatpush1.msra.mxu0 %v385
    %404 = vmatprep.subr.mxu0 0.0
    %405 = vmatpush1.msra.mxu0 %v386
    %406 = vmatprep.subr.mxu0 0.0
    %407 = vmatpush1.msra.mxu0 %v387
    %408 = vmatprep.subr.mxu0 0.0
    %409 = vmatpush1.msra.mxu0 %v388
    %410 = vmatprep.subr.mxu0 0.0
    %411 = vmatpush1.msra.mxu0 %v389
    %412 = vmatprep.subr.mxu0 0.0
    %413 = vmatpush1.msra.mxu0 %v390
    %414 = vmatprep.subr.mxu0 0.0
    %415 = vmatpush1.msra.mxu0 %v391
    %416 = vmatprep.subr.mxu0 0.0
    %417 = vmatpush1.msra.mxu0 %v392
    %418 = vmatprep.subr.mxu0 0.0
    %419 = vmatpush1.msra.mxu0 %v393
    %420 = vmatprep.subr.mxu0 0.0
    %421 = vmatpush1.msra.mxu0 %v394
    %422 = vmatprep.subr.mxu0 0.0
    %423 = vmatpush1.msra.mxu0 %v395
    %424 = vmatprep.subr.mxu0 0.0
    %425 = vmatpush1.msra.mxu0 %v396
    %426 = vmatprep.subr.mxu0 0.0
    %427 = vmatpush1.msra.mxu0 %v397
    %428 = vmatprep.subr.mxu0 0.0
    %429 = vmatpush1.msra.mxu0 %v398
    %430 = vmatprep.subr.mxu0 0.0
    %431 = vmatpush1.msra.mxu0 %v399
    %432 = vmatprep.subr.mxu0 0.0
    %433 = vmatpush1.msra.mxu0 %v400
    %434 = vmatprep.subr.mxu0 0.0
    %435 = vmatpush1.msra.mxu0 0.0
    %436 = vmatprep.subr.mxu0 0.0
    %437 = vmatpush1.msra.mxu0 0.0
    %438 = vmatprep.subr.mxu0 0.0
    %439 = vmatpush1.msra.mxu0 0.0
    %440 = vmatprep.subr.mxu0 0.0
    %441 = vmatpush1.msra.mxu0 0.0
    %442 = vmatprep.subr.mxu0 0.0
    %443 = vmatpush1.msra.mxu0 0.0
    %444 = vmatprep.subr.mxu0 0.0
    %445 = vmatpush1.msra.mxu0 0.0
    %446 = vmatprep.subr.mxu0 0.0
    %447 = vmatpush1.msra.mxu0 0.0
    %448 = vmatprep.subr.mxu0 0.0
    %449 = vmatpush1.msra.mxu0 0.0
    %450 = vmatprep.subr.mxu0 0.0
    %451 = vmatpush1.msra.mxu0 0.0
    %452 = vmatprep.subr.mxu0 0.0
    %453 = vmatpush1.msra.mxu0 0.0
    %454 = vmatprep.subr.mxu0 0.0
    %455 = vmatpush1.msra.mxu0 0.0
    %456 = vmatprep.subr.mxu0 0.0
    %457 = vmatpush1.msra.mxu0 0.0
    %458 = vmatprep.subr.mxu0 0.0
    %459 = vmatpush1.msra.mxu0 0.0
    %460 = vmatprep.subr.mxu0 0.0
    %461 = vmatpush1.msra.mxu0 0.0
    %462 = vmatprep.subr.mxu0 0.0
    %463 = vmatpush1.msra.mxu0 0.0
    %464 = vmatprep.subr.mxu0 0.0
    %465 = vmatpush1.msra.mxu0 0.0
    %466 = vmatprep.mubr.f32.mxu0 0.0
    %467 = vmatmul.mubr.f32.gmra.mrb[0].mxu0 %v384
    %v468 = vpop.f32.mrb[0].mxu0
    %v469 = vadd.f32 0.0, %v468
    %v470 = vpop.f32.mrb[0].mxu0
    %471 = vdwg.mxu0
    %v473 = vlaneseq
    %v474 = vshrl.u32 %v473, 7
    %v475 = vsub.s32 0, %v474
    %v476 = vrot.slane %v401, %v475
    %v478 = vadd.f32 %v476, %v469
    %479 = vmax.xlane.f32.xlu0 %v478
    %v480 = vpop.xlane.xlu0 %479
    %v481 = vsub.f32 %v478, %v480
    %v482 = vmul.f32 %v481, 1.442695
    %v483 = vpow.pop %v482
    %v484 = vld [vmem:[#allocation13] sm:$0xff]
    %v485 = vld [vmem:[#allocation13 + $0x8] sm:$0xff]
    %v486 = vld [vmem:[#allocation13 + $0x10] sm:$0xff]
    %v487 = vld [vmem:[#allocation13 + $0x18] sm:$0xff]
    %v488 = vld [vmem:[#allocation13 + $0x20] sm:$0xff]
    %v489 = vld [vmem:[#allocation13 + $0x28] sm:$0xff]
    %v490 = vld [vmem:[#allocation13 + $0x30] sm:$0xff]
    %v491 = vld [vmem:[#allocation13 + $0x38] sm:$0xff]
    %v492 = vld [vmem:[#allocation13 + $0x40] sm:$0xff]
    %v493 = vld [vmem:[#allocation13 + $0x48] sm:$0xff]
    %v494 = vld [vmem:[#allocation13 + $0x50] sm:$0xff]
    %v495 = vld [vmem:[#allocation13 + $0x58] sm:$0xff]
    %v496 = vld [vmem:[#allocation13 + $0x60] sm:$0xff]
    %v497 = vld [vmem:[#allocation13 + $0x68] sm:$0xff]
    %v498 = vld [vmem:[#allocation13 + $0x70] sm:$0xff]
    %v499 = vld [vmem:[#allocation13 + $0x78] sm:$0xff]
    %500 = vmatprep.subr.mxu0 0.0
    %501 = vmatpush1.msra.mxu0 %v484
    %502 = vmatprep.subr.mxu0 0.0
    %503 = vmatpush1.msra.mxu0 %v485
    %504 = vmatprep.subr.mxu0 0.0
    %505 = vmatpush1.msra.mxu0 %v486
    %506 = vmatprep.subr.mxu0 0.0
    %507 = vmatpush1.msra.mxu0 %v487
    %508 = vmatprep.subr.mxu0 0.0
    %509 = vmatpush1.msra.mxu0 %v488
    %510 = vmatprep.subr.mxu0 0.0
    %511 = vmatpush1.msra.mxu0 %v489
    %512 = vmatprep.subr.mxu0 0.0
    %513 = vmatpush1.msra.mxu0 %v490
    %514 = vmatprep.subr.mxu0 0.0
    %515 = vmatpush1.msra.mxu0 %v491
    %516 = vmatprep.subr.mxu0 0.0
    %517 = vmatpush1.msra.mxu0 %v492
    %518 = vmatprep.subr.mxu0 0.0
    %519 = vmatpush1.msra.mxu0 %v493
    %520 = vmatprep.subr.mxu0 0.0
    %521 = vmatpush1.msra.mxu0 %v494
    %522 = vmatprep.subr.mxu0 0.0
    %523 = vmatpush1.msra.mxu0 %v495
    %524 = vmatprep.subr.mxu0 0.0
    %525 = vmatpush1.msra.mxu0 %v496
    %526 = vmatprep.subr.mxu0 0.0
    %527 = vmatpush1.msra.mxu0 %v497
    %528 = vmatprep.subr.mxu0 0.0
    %529 = vmatpush1.msra.mxu0 %v498
    %530 = vmatprep.subr.mxu0 0.0
    %531 = vmatpush1.msra.mxu0 %v499
    %532 = vmatprep.subr.mxu0 0.0
    %533 = vmatpush1.msra.mxu0 0.0
    %534 = vmatprep.subr.mxu0 0.0
    %535 = vmatpush1.msra.mxu0 0.0
    %536 = vmatprep.subr.mxu0 0.0
    %537 = vmatpush1.msra.mxu0 0.0
    %538 = vmatprep.subr.mxu0 0.0
    %539 = vmatpush1.msra.mxu0 0.0
    %540 = vmatprep.subr.mxu0 0.0
    %541 = vmatpush1.msra.mxu0 0.0
    %542 = vmatprep.subr.mxu0 0.0
    %543 = vmatpush1.msra.mxu0 0.0
    %544 = vmatprep.subr.mxu0 0.0
    %545 = vmatpush1.msra.mxu0 0.0
    %546 = vmatprep.subr.mxu0 0.0
    %547 = vmatpush1.msra.mxu0 0.0
    %548 = vmatprep.subr.mxu0 0.0
    %549 = vmatpush1.msra.mxu0 0.0
    %550 = vmatprep.subr.mxu0 0.0
    %551 = vmatpush1.msra.mxu0 0.0
    %552 = vmatprep.subr.mxu0 0.0
    %553 = vmatpush1.msra.mxu0 0.0
    %554 = vmatprep.subr.mxu0 0.0
    %555 = vmatpush1.msra.mxu0 0.0
    %556 = vmatprep.subr.mxu0 0.0
    %557 = vmatpush1.msra.mxu0 0.0
    %558 = vmatprep.subr.mxu0 0.0
    %559 = vmatpush1.msra.mxu0 0.0
    %560 = vmatprep.subr.mxu0 0.0
    %561 = vmatpush1.msra.mxu0 0.0
    %562 = vmatprep.subr.mxu0 0.0
    %563 = vmatpush1.msra.mxu0 0.0
    %564 = vmatprep.mubr.f32.mxu0 0.0
    %565 = vmatmul.mubr.f32.gmra.mrb[0].mxu0 %v483
    %v566 = vpop.f32.mrb[0].mxu0
    %v567 = vadd.f32 0.0, %v566
    %v568 = vpop.f32.mrb[0].mxu0
    %569 = vdwg.mxu0
    %v570 = vmax.f32 %v567, 1e-30
    %v571 = vrcp.pop %v570
    %v572 = vmul.f32 %v483, %v571
    %573 = vst [vmem:[#allocation14] sm:$0xff] %v572
    // Predicated region
    $region70: #{tpu_custom_call.1} parent=1 // pred_check
      _
    $region71: #{tpu_custom_call.1} parent=1 // pred_check_branch
      %575 = sbr.rel (0) target = $region73
    $region72: #{tpu_custom_call.1} parent=1 // pred_region
      %s577 = ssub.s32 128, 128
      %578 = vsyncadd [#allocation4], %s577
      %s580 = sshll.u32 [#allocation14], 4
      %s581 = int_to_ptr.vmem [resolvable:$true] %s580
      %583 = dma.vmem_to_hbm [thread:$0]  %s581, 128, %s10, [#allocation4]
    $region73: #{tpu_custom_call.1} parent=1 // pred_fallthru
      _
    // Predicated region
    $region74: #{tpu_custom_call.1} parent=1 // pred_check
      _
    $region75: #{tpu_custom_call.1} parent=1 // pred_check_branch
      %585 = sbr.rel (0) target = $region77
    $region76: #{tpu_custom_call.1} parent=1 // pred_region
      %586 = dma.done [#allocation4], 128
    $region77: #{tpu_custom_call.1} parent=1 // pred_fallthru
      _
    %587 = vsyncpa [#allocation3], 1
    %588 = vsyncpa [#allocation6], 1
    %589 = vsyncpa [#allocation9], 1
    %590 = vsyncpa [#allocation12], 1
    %591 = vsyncpa [#allocation4], 1

</llo_original>
